<compile_context>
chip_gen: v6e
topology: v6e:2x2x1
jax: 0.10.0
libtpu: 0.0.40
codegen_flags: <defaults>
</compile_context>

<pallas_src>
import functools

import jax
import jax.numpy as jnp
import numpy as np
from jax.experimental import pallas as pl
from jax.experimental.pallas import tpu as pltpu

_LANE = 128
_MAX_BLOCK_ROWS = 1024  # 1024 * 128 * 4B = 512 KiB per operand block


def make_positional_encoding(pad_size: int, embed: int) -> jnp.ndarray:
    """Deterministic sinusoidal PE table, same recipe as the PyTorch __init__."""
    pos = np.arange(pad_size, dtype=np.float32)[:, None]          # [S, 1]
    i = np.arange(embed, dtype=np.float32)[None, :]                # [1, E]
    angle = pos / np.power(10000.0, (np.floor(i / 2.0) * 2.0) / embed)
    pe = np.zeros((pad_size, embed), dtype=np.float32)
    pe[:, 0::2] = np.sin(angle[:, 0::2])
    pe[:, 1::2] = np.cos(angle[:, 1::2])
    return jnp.asarray(pe)


def _add_pe_kernel(x_ref, pe_ref, o_ref):
    # Eval mode (dropout is identity): plain same-shape elementwise add.
    o_ref[...] = (x_ref[...] + pe_ref[...]).astype(o_ref.dtype)


def _add_pe_dropout_kernel(x_ref, pe_ref, bits_ref, o_ref, *, threshold: int, scale: float):
    # Train mode: keep element iff its uniform u32 >= threshold (P(keep) = 1 - p),
    # scale kept values by 1/(1-p). Integer-domain compare: no shift/convert/mul.
    s = x_ref[...] + pe_ref[...]
    keep = bits_ref[...] >= jnp.uint32(threshold)
    o_ref[...] = jnp.where(keep, s * scale, jnp.zeros_like(s)).astype(o_ref.dtype)


def positional_encoding_forward(x: jnp.ndarray,
                                pe: jnp.ndarray,
                                *,
                                dropout_p: float = 0.1,
                                train: bool = True,
                                rng_key=None) -> jnp.ndarray:
    """out = dropout(x + pe), x: [B, S, E], pe: [S, E]."""
    B, S, E = x.shape
    assert pe.shape == (S, E)
    out_dtype = x.dtype
    total = B * S * E

    # Lane-dense flat view: [rows, 128]. PE is pre-broadcast/tiled once in the
    # wrapper so the kernel sees a same-layout slab (plain elementwise add).
    pad = (-total) % _LANE
    x_flat = x.reshape(-1)
    pe_flat = jnp.broadcast_to(pe[None, :, :].astype(out_dtype), (B, S, E)).reshape(-1)
    if pad:
        x_flat = jnp.pad(x_flat, (0, pad))
        pe_flat = jnp.pad(pe_flat, (0, pad))
    rows = (total + pad) // _LANE
    x2 = x_flat.reshape(rows, _LANE)
    pe2 = pe_flat.reshape(rows, _LANE)

    # Block sizing: whole array in one step when small; otherwise 512 KiB blocks.
    block_rows = rows if rows <= _MAX_BLOCK_ROWS else _MAX_BLOCK_ROWS
    grid = (pl.cdiv(rows, block_rows),)
    spec = pl.BlockSpec((block_rows, _LANE), lambda i: (i, 0))

    compiler_params = pltpu.CompilerParams(dimension_semantics=("parallel",))

    use_dropout = bool(train) and float(dropout_p) > 0.0
    if use_dropout:
        p = float(dropout_p)
        assert p < 1.0, "dropout_p must be < 1"
        if rng_key is None:
            rng_key = jax.random.PRNGKey(0)
        bits = jax.random.bits(rng_key, (rows, _LANE), dtype=jnp.uint32)
        threshold = min(int(round(p * (2 ** 32))), 2 ** 32 - 1)
        kernel = functools.partial(_add_pe_dropout_kernel,
                                   threshold=threshold,
                                   scale=1.0 / (1.0 - p))
        out2 = pl.pallas_call(
            kernel,
            out_shape=jax.ShapeDtypeStruct((rows, _LANE), out_dtype),
            grid=grid,
            in_specs=[spec, spec, spec],
            out_specs=spec,
            compiler_params=compiler_params,
        )(x2, pe2, bits)
    else:
        out2 = pl.pallas_call(
            _add_pe_kernel,
            out_shape=jax.ShapeDtypeStruct((rows, _LANE), out_dtype),
            grid=grid,
            in_specs=[spec, spec],
            out_specs=spec,
            compiler_params=compiler_params,
        )(x2, pe2)

    return out2.reshape(-1)[:total].reshape(B, S, E)


if __name__ == "__main__":
    # Module config implied by the spec: embed=32, pad_size=8, dropout=0.1
    B, S, E = 2, 8, 32
    dropout_p = 0.1

    key = jax.random.PRNGKey(0)
    kx, kd = jax.random.split(key)
    x = jax.random.normal(kx, (B, S, E), dtype=jnp.float32)
    pe = make_positional_encoding(S, E)

    ref = np.asarray(x) + np.asarray(pe)[None, :, :]

    # Eval-mode check (dropout is identity): out == x + pe exactly.
    out_eval = jax.block_until_ready(
        positional_encoding_forward(x, pe, dropout_p=dropout_p, train=False))
    np.testing.assert_allclose(np.asarray(out_eval), ref, rtol=1e-6, atol=1e-6)

    # Train-mode run: every element must be either dropped (0) or (x+pe)/(1-p).
    out_train = jax.block_until_ready(
        positional_encoding_forward(x, pe, dropout_p=dropout_p, train=True, rng_key=kd))
    assert out_train.shape == (B, S, E)
    scale = 1.0 / (1.0 - dropout_p)
    ot = np.asarray(out_train)
    ok = np.isclose(ot, 0.0, atol=1e-6) | np.isclose(ot, ref * scale, rtol=1e-5, atol=1e-6)
    assert bool(ok.all())

    print("KERNEL_OK")
</pallas_src>

<mosaic_0001>
module attributes {stable_mosaic.version = 11 : i64} {
  func.func @_add_pe_kernel(%arg0: i32, %arg1: memref<4x128xf32, #tpu.memory_space<vmem>>, %arg2: memref<4x128xf32, #tpu.memory_space<vmem>>, %arg3: memref<4x128xf32, #tpu.memory_space<vmem>>) attributes {dimension_semantics = [#tpu.dimension_semantics<parallel>], iteration_bounds = array<i64: 1>, scalar_prefetch = 0 : i64, scratch_operands = 0 : i64, tpu.core_type = #tpu.core_type<tc>, window_params = [{transform_indices = @transform_0, window_bounds = array<i64: 4, 128>}, {transform_indices = @transform_1, window_bounds = array<i64: 4, 128>}, {transform_indices = @transform_2, window_bounds = array<i64: 4, 128>}]} {
    %c0 = arith.constant 0 : index
    %c0_0 = arith.constant 0 : index
    %0 = vector.load %arg1[%c0, %c0_0] : memref<4x128xf32, #tpu.memory_space<vmem>>, vector<4x128xf32>
    %c0_1 = arith.constant 0 : index
    %c0_2 = arith.constant 0 : index
    %1 = vector.load %arg2[%c0_1, %c0_2] : memref<4x128xf32, #tpu.memory_space<vmem>>, vector<4x128xf32>
    %2 = arith.addf %0, %1 : vector<4x128xf32>
    %c0_3 = arith.constant 0 : index
    %c0_4 = arith.constant 0 : index
    %3 = vector.load %arg3[%c0_3, %c0_4] : memref<4x128xf32, #tpu.memory_space<vmem>>, vector<4x128xf32>
    tpu.vector_store %arg3[%c0_3, %c0_4], %2 {strides = array<i32>} : memref<4x128xf32, #tpu.memory_space<vmem>>, vector<4x128xf32>,
    return
  }
  func.func @transform_0(%arg0: i32) -> (i32, i32) {
    %c0_i32 = arith.constant 0 : i32
    %c0_i32_0 = arith.constant 0 : i32
    return %arg0, %c0_i32 : i32, i32
  }
  func.func @transform_1(%arg0: i32) -> (i32, i32) {
    %c0_i32 = arith.constant 0 : i32
    %c0_i32_0 = arith.constant 0 : i32
    return %arg0, %c0_i32 : i32, i32
  }
  func.func @transform_2(%arg0: i32) -> (i32, i32) {
    %c0_i32 = arith.constant 0 : i32
    %c0_i32_0 = arith.constant 0 : i32
    return %arg0, %c0_i32 : i32, i32
  }
}

</mosaic_0001>

<llo_original>
// kernel: tpu_custom_call.1
$region0: #{tpu_custom_call.1}
  #allocation0 [shape = 'u32[]', space=smem, size = 0x4, offset = 0x4, fixed_abs, tag = 'smem constant byte address 0x4 - core index']
  #allocation1 [shape = 'u32[144,128]{1,0:T(1,128)}', space=vmem, size = 0x12000, scoped, tag = 'internal scratch']
  %s0 = inlined_call_operand.hbm [shape: f32[4,128], index: 0, kind: input, shape index: {}]
  %s1 = inlined_call_operand.hbm [shape: f32[4,128], index: 1, kind: input, shape index: {}]
  %s2 = inlined_call_operand.hbm [shape: f32[4,128], index: 2, kind: output, shape index: {}]
  %s3 = sld [smem:[#allocation0]]
  $region26: #{tpu_custom_call.1} parent=0
    _
  %s5 = ssub.s32 1, %s3
  %s6 = scalar_select 0, %s5, %s3
  $region1: #{tpu_custom_call.1} parent=0
    #allocation2 [shape = 'u8[2048]{0}', space=vmem, size = 0x800, scoped, tag = 'input window, operand 0, single buffered']
    #allocation3 [shape = 's32[1]{0}', space=sflag, size = 0x4, scoped, tag = 'scoped memory for tpu_custom_call.1']
    #allocation4 [shape = 's32[1]{0}', space=sflag, size = 0x4, scoped, tag = 'scoped memory for tpu_custom_call.1']
    #allocation5 [shape = 'u8[2048]{0}', space=vmem, size = 0x800, scoped, tag = 'input window, operand 1, single buffered']
    #allocation6 [shape = 's32[1]{0}', space=sflag, size = 0x4, scoped, tag = 'scoped memory for tpu_custom_call.1']
    #allocation7 [shape = 'u8[2048]{0}', space=vmem, size = 0x800, scoped, tag = 'output window, operand 0, single buffered']
    %7 = vsyncpa [#allocation3], 0
    %8 = vsyncpa [#allocation6], 0
    %9 = vsyncpa [#allocation4], 0
    // Predicated region
    $region2: #{tpu_custom_call.1} parent=1 // pred_check
      _
    $region3: #{tpu_custom_call.1} parent=1 // pred_check_branch
      %11 = sbr.rel (0) target = $region5
    $region4: #{tpu_custom_call.1} parent=1 // pred_region
      %s13 = ssub.s32 64, 64
      %14 = vsyncadd [#allocation3], %s13
      %s16 = sshll.u32 [#allocation2], 4
      %s17 = int_to_ptr.vmem [resolvable:$true] %s16
      %19 = dma.hbm_to_vmem [thread:$0]  %s0, 64, %s17, [#allocation3]
    $region5: #{tpu_custom_call.1} parent=1 // pred_fallthru
      _
    // Predicated region
    $region6: #{tpu_custom_call.1} parent=1 // pred_check
      _
    $region7: #{tpu_custom_call.1} parent=1 // pred_check_branch
      %21 = sbr.rel (0) target = $region9
    $region8: #{tpu_custom_call.1} parent=1 // pred_region
      %s23 = ssub.s32 64, 64
      %24 = vsyncadd [#allocation6], %s23
      %s26 = sshll.u32 [#allocation5], 4
      %s27 = int_to_ptr.vmem [resolvable:$true] %s26
      %29 = dma.hbm_to_vmem [thread:$0]  %s1, 64, %s27, [#allocation6]
    $region9: #{tpu_custom_call.1} parent=1 // pred_fallthru
      _
    // Predicated region
    $region10: #{tpu_custom_call.1} parent=1 // pred_check
      _
    $region11: #{tpu_custom_call.1} parent=1 // pred_check_branch
      %31 = sbr.rel (0) target = $region13
    $region12: #{tpu_custom_call.1} parent=1 // pred_region
      %32 = dma.done [#allocation3], 64
    $region13: #{tpu_custom_call.1} parent=1 // pred_fallthru
      _
    // Predicated region
    $region14: #{tpu_custom_call.1} parent=1 // pred_check
      _
    $region15: #{tpu_custom_call.1} parent=1 // pred_check_branch
      %34 = sbr.rel (0) target = $region17
    $region16: #{tpu_custom_call.1} parent=1 // pred_region
      %35 = dma.done [#allocation6], 64
    $region17: #{tpu_custom_call.1} parent=1 // pred_fallthru
      _
    %v36 = vld [vmem:[#allocation2] sm:$0xf]
    %v37 = vld [vmem:[#allocation5] sm:$0xf]
    %v38 = vadd.f32 %v36, %v37
    %39 = vst [vmem:[#allocation7] sm:$0xf] %v38
    // Predicated region
    $region18: #{tpu_custom_call.1} parent=1 // pred_check
      _
    $region19: #{tpu_custom_call.1} parent=1 // pred_check_branch
      %41 = sbr.rel (0) target = $region21
    $region20: #{tpu_custom_call.1} parent=1 // pred_region
      %s43 = ssub.s32 64, 64
      %44 = vsyncadd [#allocation4], %s43
      %s46 = sshll.u32 [#allocation7], 4
      %s47 = int_to_ptr.vmem [resolvable:$true] %s46
      %49 = dma.vmem_to_hbm [thread:$0]  %s47, 64, %s2, [#allocation4]
    $region21: #{tpu_custom_call.1} parent=1 // pred_fallthru
      _
    // Predicated region
    $region22: #{tpu_custom_call.1} parent=1 // pred_check
      _
    $region23: #{tpu_custom_call.1} parent=1 // pred_check_branch
      %51 = sbr.rel (0) target = $region25
    $region24: #{tpu_custom_call.1} parent=1 // pred_region
      %52 = dma.done [#allocation4], 64
    $region25: #{tpu_custom_call.1} parent=1 // pred_fallthru
      _
    %53 = vsyncpa [#allocation3], 1
    %54 = vsyncpa [#allocation6], 1
    %55 = vsyncpa [#allocation4], 1

</llo_original>
